<compile_context>
chip_gen: v7x
topology: tpu7x:2x2x1
jax: 0.10.0
libtpu: 0.0.40
codegen_flags: <defaults>
</compile_context>

<pallas_src>
import jax
import jax.numpy as jnp
from jax.experimental import pallas as pl
from jax.experimental.pallas import tpu as pltpu


def _round_up(a, b):
    return ((a + b - 1) // b) * b


def _cdiv(a, b):
    return (a + b - 1) // b


def _vmem_budget_bytes():
    """Generation-aware VMEM budget for pipeline buffers + compiler limit."""
    phys = 64 * 1024 * 1024  # conservative fallback: v7x per-TC physical VMEM
    try:
        phys = int(pltpu.get_tpu_info().vmem_capacity_bytes)
    except Exception:
        pass
    # ~40% of physical VMEM for the double-buffered tiles, capped so a tile
    # chosen on v5e/v6e (128 MiB) is still safe on v7x (64 MiB per TC).
    budget = min((phys * 2) // 5, 48 * 1024 * 1024)
    limit = min(phys, budget + 8 * 1024 * 1024)
    return budget, int(limit)


def _pick_tiles(N, HW, cin, cout, in_itemsize, out_itemsize, budget,
                max_lanes=64 * 1024):
    """Pick (samples-per-block, pixel-tile, num-pixel-tiles).

    Buffer accounting matches the actual pipeline: 2 buffers each for the x
    tile and the out tile (weight/bias are a few KiB and ignored). Channel
    axes are padded to 8 sublanes, as they will be in VMEM.
    """
    cin_p = _round_up(cin, 8)
    cout_p = _round_up(cout, 8)
    bytes_per_col = 2 * (cin_p * in_itemsize + cout_p * out_itemsize)
    t_max = max(128, (budget // bytes_per_col) // 128 * 128)
    t_max = min(t_max, max_lanes)

    if HW > t_max:
        # Split the pixel axis; choosing k first bounds padding to <=127 lanes.
        k = _cdiv(HW, t_max)
        t_hw = _round_up(_cdiv(HW, k), 128)
        nb = 1
    else:
        # Whole sample fits one tile: fold batch into the block to amortize
        # the ~0.35us per-grid-step overhead.
        k = 1
        t_hw = _round_up(HW, 128)
        nb_cap = max(1, min(N, budget // (t_hw * bytes_per_col)))
        nb = 1
        for d in range(nb_cap, 0, -1):
            if N % d == 0:
                nb = d
                break

    # If the whole problem collapsed to a single grid step on a large image,
    # split the pixel axis in two so v7x's two TensorCores both get work.
    if (N // nb) * k == 1 and HW >= 8192:
        k = 2
        t_hw = _round_up(_cdiv(HW, k), 128)
    return nb, t_hw, k


def _outconv_kernel(x_ref, w_ref, b_ref, o_ref):
    # x_ref: (Nb, Cin, t_hw)   pixel axis lane-dense (last dim, mult. of 128)
    # w_ref: (Cout, Cin)       full weight, VMEM-resident
    # b_ref: (Cout, 1)         float32 bias column (broadcasts over lanes)
    # o_ref: (Nb, Cout, t_hw)  lane-dense output tile
    w = w_ref[...]
    b = b_ref[...]  # f32
    for i in range(x_ref.shape[0]):  # Nb is a small static constant
        acc = jnp.dot(w, x_ref[i], preferred_element_type=jnp.float32)
        o_ref[i] = (acc + b).astype(o_ref.dtype)


def outconv_pallas(x_nchw, weight, bias, *, compute_dtype=None, out_dtype=None):
    """1x1 conv matching nn.Conv2d(in_channels, out_channels, kernel_size=1).

    x_nchw: (N, Cin, H, W)
    weight: (Cout, Cin, 1, 1)   (PyTorch layout)
    bias:   (Cout,)
    compute_dtype: dtype for x/weight inside the kernel (e.g. bf16 to halve
                   HBM traffic); accumulation is always f32.
    out_dtype:     output dtype (defaults to x dtype).
    returns (N, Cout, H, W)
    """
    N, Cin, H, W = x_nchw.shape
    Cout = weight.shape[0]
    HW = H * W

    cdt = jnp.dtype(compute_dtype) if compute_dtype is not None else jnp.dtype(x_nchw.dtype)
    odt = jnp.dtype(out_dtype) if out_dtype is not None else jnp.dtype(x_nchw.dtype)

    # Pure reshapes / casts — no transposes; the kernel's HBM traffic is the
    # only significant data movement (this op is purely bandwidth-bound).
    x_view = x_nchw.reshape(N, Cin, HW).astype(cdt)
    w_mat = weight.reshape(Cout, Cin).astype(cdt)           # (Cout, Cin)
    b_col = bias.reshape(Cout, 1).astype(jnp.float32)       # f32, no rounding

    budget, vmem_limit = _vmem_budget_bytes()
    nb, t_hw, k = _pick_tiles(N, HW, Cin, Cout, cdt.itemsize, odt.itemsize, budget)

    HWp = k * t_hw
    if HWp != HW:
        # Zero-pad the pixel axis (bounded by <=127 lanes + tile rounding);
        # padded columns yield bias-only values and are sliced off below.
        x_view = jnp.pad(x_view, ((0, 0), (0, 0), (0, HWp - HW)))

    grid = (N // nb, k)

    cost = pl.CostEstimate(
        flops=2 * N * HW * Cin * Cout,
        transcendentals=0,
        bytes_accessed=(N * Cin * HW * cdt.itemsize          # read x
                        + N * Cout * HW * odt.itemsize       # write y
                        + Cout * Cin * cdt.itemsize          # weight
                        + Cout * 4),                         # f32 bias
    )

    out = pl.pallas_call(
        _outconv_kernel,
        out_shape=jax.ShapeDtypeStruct((N, Cout, HWp), odt),
        grid_spec=pltpu.PrefetchScalarGridSpec(
            num_scalar_prefetch=0,
            grid=grid,
            in_specs=[
                pl.BlockSpec((nb, Cin, t_hw), lambda n, j: (n, 0, j)),
                pl.BlockSpec((Cout, Cin), lambda n, j: (0, 0)),   # full weight
                pl.BlockSpec((Cout, 1), lambda n, j: (0, 0)),     # full bias
            ],
            out_specs=pl.BlockSpec((nb, Cout, t_hw), lambda n, j: (n, 0, j)),
        ),
        compiler_params=pltpu.CompilerParams(
            dimension_semantics=("parallel", "parallel"),
            vmem_limit_bytes=vmem_limit,
        ),
        cost_estimate=cost,
    )(x_view, w_mat, b_col)

    if HWp != HW:
        out = out[:, :, :HW]
    return out.reshape(N, Cout, H, W)


def _reference(x, weight, bias):
    Cout, Cin = weight.shape[0], weight.shape[1]
    return (jnp.einsum("nchw,oc->nohw", x, weight.reshape(Cout, Cin))
            + bias[None, :, None, None])


if __name__ == "__main__":
    key = jax.random.PRNGKey(0)
    k_x, k_w, k_b, k_x2 = jax.random.split(key, 4)

    # Shapes consistent with OutConv as a small segmentation head.
    N, Cin, Cout, H, W = 2, 4, 3, 16, 16

    x = jax.random.normal(k_x, (N, Cin, H, W), dtype=jnp.float32)
    weight = jax.random.normal(k_w, (Cout, Cin, 1, 1), dtype=jnp.float32) * 0.1
    bias = jax.random.normal(k_b, (Cout,), dtype=jnp.float32) * 0.1

    # f32 path — tight check against the einsum reference.
    y = jax.block_until_ready(outconv_pallas(x, weight, bias))
    y_ref = _reference(x, weight, bias)
    assert y.shape == (N, Cout, H, W)
    assert jnp.allclose(y, y_ref, atol=1e-5, rtol=1e-5)

    # Ragged spatial size exercises the pixel-axis padding path.
    H2, W2 = 10, 10
    x2 = jax.random.normal(k_x2, (N, Cin, H2, W2), dtype=jnp.float32)
    y2 = jax.block_until_ready(outconv_pallas(x2, weight, bias))
    y2_ref = _reference(x2, weight, bias)
    assert y2.shape == (N, Cout, H2, W2)
    assert jnp.allclose(y2, y2_ref, atol=1e-5, rtol=1e-5)

    # bf16 I/O path (halves HBM bytes; f32 accumulation + f32 bias add kept).
    y3 = jax.block_until_ready(
        outconv_pallas(x, weight, bias,
                       compute_dtype=jnp.bfloat16, out_dtype=jnp.float32))
    assert y3.shape == (N, Cout, H, W)
    assert jnp.allclose(y3, y_ref, atol=3e-2, rtol=3e-2)

    print("KERNEL_OK")
</pallas_src>

<mosaic_0001>
module attributes {stable_mosaic.version = 11 : i64} {
  func.func @_outconv_kernel(%arg0: i32, %arg1: i32, %arg2: memref<2x4x256xf32, #tpu.memory_space<vmem>>, %arg3: memref<3x4xf32, #tpu.memory_space<vmem>>, %arg4: memref<3x1xf32, #tpu.memory_space<vmem>>, %arg5: memref<2x3x256xf32, #tpu.memory_space<vmem>>) attributes {dimension_semantics = [#tpu.dimension_semantics<parallel>, #tpu.dimension_semantics<parallel>], iteration_bounds = array<i64: 1, 1>, scalar_prefetch = 0 : i64, scratch_operands = 0 : i64, tpu.core_type = #tpu.core_type<tc>, window_params = [{transform_indices = @transform_0, window_bounds = array<i64: 2, 4, 256>}, {pipeline_mode = #tpu.pipeline_mode<synchronous>, transform_indices = @transform_1, window_bounds = array<i64: 3, 4>}, {pipeline_mode = #tpu.pipeline_mode<synchronous>, transform_indices = @transform_2, window_bounds = array<i64: 3, 1>}, {transform_indices = @transform_3, window_bounds = array<i64: 2, 3, 256>}]} {
    %c0 = arith.constant 0 : index
    %c0_0 = arith.constant 0 : index
    %0 = vector.load %arg3[%c0, %c0_0] : memref<3x4xf32, #tpu.memory_space<vmem>>, vector<3x4xf32>
    %c0_1 = arith.constant 0 : index
    %c0_2 = arith.constant 0 : index
    %1 = vector.load %arg4[%c0_1, %c0_2] : memref<3x1xf32, #tpu.memory_space<vmem>>, vector<3x1xf32>
    %c0_3 = arith.constant 0 : index
    %c0_4 = arith.constant 0 : index
    %c0_5 = arith.constant 0 : index
    %2 = vector.load %arg2[%c0_3, %c0_4, %c0_5] : memref<2x4x256xf32, #tpu.memory_space<vmem>>, vector<1x4x256xf32>
    %3 = vector.shape_cast %2 : vector<1x4x256xf32> to vector<4x256xf32>
    %cst = arith.constant dense<0.000000e+00> : vector<3x256xf32>
    %4 = tpu.matmul %0, %3, %cst {dimension_numbers = #tpu.dot_dimension_numbers<[1], [0], [0], [1], [0, 0, 1, 1], [], []>} : vector<3x4xf32>, vector<4x256xf32>, vector<3x256xf32> -> vector<3x256xf32>
    %5 = vector.broadcast %1 : vector<3x1xf32> to vector<3x256xf32>
    %6 = arith.addf %4, %5 : vector<3x256xf32>
    %c0_6 = arith.constant 0 : index
    %c0_7 = arith.constant 0 : index
    %c0_8 = arith.constant 0 : index
    %7 = vector.load %arg5[%c0_6, %c0_7, %c0_8] : memref<2x3x256xf32, #tpu.memory_space<vmem>>, vector<1x3x256xf32>
    %8 = vector.shape_cast %7 : vector<1x3x256xf32> to vector<3x256xf32>
    %9 = vector.shape_cast %6 : vector<3x256xf32> to vector<1x3x256xf32>
    tpu.vector_store %arg5[%c0_6, %c0_7, %c0_8], %9 {strides = array<i32>} : memref<2x3x256xf32, #tpu.memory_space<vmem>>, vector<1x3x256xf32>,
    %c1 = arith.constant 1 : index
    %c0_9 = arith.constant 0 : index
    %c0_10 = arith.constant 0 : index
    %10 = vector.load %arg2[%c1, %c0_9, %c0_10] : memref<2x4x256xf32, #tpu.memory_space<vmem>>, vector<1x4x256xf32>
    %11 = vector.shape_cast %10 : vector<1x4x256xf32> to vector<4x256xf32>
    %cst_11 = arith.constant dense<0.000000e+00> : vector<3x256xf32>
    %12 = tpu.matmul %0, %11, %cst_11 {dimension_numbers = #tpu.dot_dimension_numbers<[1], [0], [0], [1], [0, 0, 1, 1], [], []>} : vector<3x4xf32>, vector<4x256xf32>, vector<3x256xf32> -> vector<3x256xf32>
    %13 = vector.broadcast %1 : vector<3x1xf32> to vector<3x256xf32>
    %14 = arith.addf %12, %13 : vector<3x256xf32>
    %c1_12 = arith.constant 1 : index
    %c0_13 = arith.constant 0 : index
    %c0_14 = arith.constant 0 : index
    %15 = vector.load %arg5[%c1_12, %c0_13, %c0_14] : memref<2x3x256xf32, #tpu.memory_space<vmem>>, vector<1x3x256xf32>
    %16 = vector.shape_cast %15 : vector<1x3x256xf32> to vector<3x256xf32>
    %17 = vector.shape_cast %14 : vector<3x256xf32> to vector<1x3x256xf32>
    tpu.vector_store %arg5[%c1_12, %c0_13, %c0_14], %17 {strides = array<i32>} : memref<2x3x256xf32, #tpu.memory_space<vmem>>, vector<1x3x256xf32>,
    return
  }
  func.func @transform_0(%arg0: i32, %arg1: i32) -> (i32, i32, i32) {
    %c0_i32 = arith.constant 0 : i32
    %c0_i32_0 = arith.constant 0 : i32
    return %arg0, %c0_i32, %arg1 : i32, i32, i32
  }
  func.func @transform_1(%arg0: i32, %arg1: i32) -> (i32, i32) {
    %c0_i32 = arith.constant 0 : i32
    %c0_i32_0 = arith.constant 0 : i32
    %c0_i32_1 = arith.constant 0 : i32
    return %c0_i32, %c0_i32_0 : i32, i32
  }
  func.func @transform_2(%arg0: i32, %arg1: i32) -> (i32, i32) {
    %c0_i32 = arith.constant 0 : i32
    %c0_i32_0 = arith.constant 0 : i32
    %c0_i32_1 = arith.constant 0 : i32
    return %c0_i32, %c0_i32_0 : i32, i32
  }
  func.func @transform_3(%arg0: i32, %arg1: i32) -> (i32, i32, i32) {
    %c0_i32 = arith.constant 0 : i32
    %c0_i32_0 = arith.constant 0 : i32
    return %arg0, %c0_i32, %arg1 : i32, i32, i32
  }
}

</mosaic_0001>

<llo_original>
// kernel: tpu_custom_call.1
$region0: #{tpu_custom_call.1}
  #allocation0 [shape = 'u32[]', space=smem, size = 0x4, offset = 0x4, fixed_abs, tag = 'smem constant byte address 0x4 - core index']
  #allocation1 [shape = 'u32[144,128]{1,0:T(1,128)}', space=vmem, size = 0x12000, scoped, tag = 'internal scratch']
  %s0 = inlined_call_operand.hbm [shape: f32[2,4,256], index: 0, kind: input, shape index: {}]
  %s1 = inlined_call_operand.vmem [shape: f32[3,4], index: 1, kind: input, shape index: {}]
  %s2 = inlined_call_operand.vmem [shape: f32[3,1], index: 2, kind: input, shape index: {}]
  %s3 = inlined_call_operand.vmem [shape: f32[2,3,256], index: 3, kind: output, shape index: {}]
  %s4 = sld [smem:[#allocation0]]
  $region26: #{tpu_custom_call.1} parent=0
    _
  %s6 = ssub.s32 1, %s4
  %s7 = scalar_select 0, %s6, %s4
  $region1: #{tpu_custom_call.1} parent=0
    #allocation2 [shape = 'u8[8192]{0}', space=vmem, size = 0x2000, scoped, tag = 'input window, operand 0, single buffered']
    #allocation3 [shape = 's32[1]{0}', space=sflag, size = 0x4, scoped, tag = 'scoped memory for tpu_custom_call.1']
    %8 = vsyncpa [#allocation3], 0
    // Predicated region
    $region2: #{tpu_custom_call.1} parent=1 // pred_check
      _
    $region3: #{tpu_custom_call.1} parent=1 // pred_check_branch
      %10 = sbr.rel (0) target = $region5
    $region4: #{tpu_custom_call.1} parent=1 // pred_region
      %s12 = ssub.s32 256, 256
      %13 = vsyncadd [#allocation3], %s12
      %s14 = sshll.u32 [#allocation2], 4
      %s15 = int_to_ptr.vmem [resolvable:$true] %s14
      %20 = dma.hbm_to_vmem [thread:$0]  %s0, 256, %s15, [#allocation3], 128, 128, 8
    $region5: #{tpu_custom_call.1} parent=1 // pred_fallthru
      _
    // Predicated region
    $region6: #{tpu_custom_call.1} parent=1 // pred_check
      _
    $region7: #{tpu_custom_call.1} parent=1 // pred_check_branch
      %22 = sbr.rel (0) target = $region9
    $region8: #{tpu_custom_call.1} parent=1 // pred_region
      _
    $region9: #{tpu_custom_call.1} parent=1 // pred_fallthru
      _
    // Predicated region
    $region10: #{tpu_custom_call.1} parent=1 // pred_check
      _
    $region11: #{tpu_custom_call.1} parent=1 // pred_check_branch
      %24 = sbr.rel (0) target = $region13
    $region12: #{tpu_custom_call.1} parent=1 // pred_region
      _
    $region13: #{tpu_custom_call.1} parent=1 // pred_fallthru
      _
    // Predicated region
    $region14: #{tpu_custom_call.1} parent=1 // pred_check
      _
    $region15: #{tpu_custom_call.1} parent=1 // pred_check_branch
      %26 = sbr.rel (0) target = $region17
    $region16: #{tpu_custom_call.1} parent=1 // pred_region
      %27 = dma.done [#allocation3], 256
    $region17: #{tpu_custom_call.1} parent=1 // pred_fallthru
      _
    %v28 = vld [vmem:[%s1] sm:$0x7]
    %v29 = vld [vmem:[%s2] sm:$0x7]
    %v30 = vld [vmem:[#allocation2] sm:$0xff]
    %32 = vset.pattern.permute.xlu0 0
    %33 = vperm.xlu0 %32, %v29
    %v34 = vpop.permute.xlu0 %33
    %v37 = vcombine.high %v30, %v30
    %vm38 = vcmask 31744
    %v40 = vsel %vm38, %v28, 0
    %vm42 = vcmask 1043456
    %v43 = vsel %vm42, %v30, 0
    %v45 = vsel %vm42, %v37, 0
    %47 = vmatprep.subr.mxu0 %v45
    %48 = vmatpush1.msra.mxu0 %v43
    %49 = vmatprep.subr.mxu0 0.0
    %50 = vmatpush1.msra.mxu0 0.0
    %51 = vmatprep.subr.mxu0 0.0
    %52 = vmatpush1.msra.mxu0 0.0
    %53 = vmatprep.subr.mxu0 0.0
    %54 = vmatpush1.msra.mxu0 0.0
    %55 = vmatprep.subr.mxu0 0.0
    %56 = vmatpush1.msra.mxu0 0.0
    %57 = vmatprep.subr.mxu0 0.0
    %58 = vmatpush1.msra.mxu0 0.0
    %59 = vmatprep.subr.mxu0 0.0
    %60 = vmatpush1.msra.mxu0 0.0
    %61 = vmatprep.subr.mxu0 0.0
    %62 = vmatpush1.msra.mxu0 0.0
    %63 = vmatprep.subr.mxu0 0.0
    %64 = vmatpush1.msra.mxu0 0.0
    %65 = vmatprep.subr.mxu0 0.0
    %66 = vmatpush1.msra.mxu0 0.0
    %67 = vmatprep.subr.mxu0 0.0
    %68 = vmatpush1.msra.mxu0 0.0
    %69 = vmatprep.subr.mxu0 0.0
    %70 = vmatpush1.msra.mxu0 0.0
    %71 = vmatprep.subr.mxu0 0.0
    %72 = vmatpush1.msra.mxu0 0.0
    %73 = vmatprep.subr.mxu0 0.0
    %74 = vmatpush1.msra.mxu0 0.0
    %75 = vmatprep.subr.mxu0 0.0
    %76 = vmatpush1.msra.mxu0 0.0
    %77 = vmatprep.subr.mxu0 0.0
    %78 = vmatpush1.msra.mxu0 0.0
    %79 = vmatprep.subr.mxu0 0.0
    %80 = vmatpush1.msra.mxu0 0.0
    %81 = vmatprep.subr.mxu0 0.0
    %82 = vmatpush1.msra.mxu0 0.0
    %83 = vmatprep.subr.mxu0 0.0
    %84 = vmatpush1.msra.mxu0 0.0
    %85 = vmatprep.subr.mxu0 0.0
    %86 = vmatpush1.msra.mxu0 0.0
    %87 = vmatprep.subr.mxu0 0.0
    %88 = vmatpush1.msra.mxu0 0.0
    %89 = vmatprep.subr.mxu0 0.0
    %90 = vmatpush1.msra.mxu0 0.0
    %91 = vmatprep.subr.mxu0 0.0
    %92 = vmatpush1.msra.mxu0 0.0
    %93 = vmatprep.subr.mxu0 0.0
    %94 = vmatpush1.msra.mxu0 0.0
    %95 = vmatprep.subr.mxu0 0.0
    %96 = vmatpush1.msra.mxu0 0.0
    %97 = vmatprep.subr.mxu0 0.0
    %98 = vmatpush1.msra.mxu0 0.0
    %99 = vmatprep.subr.mxu0 0.0
    %100 = vmatpush1.msra.mxu0 0.0
    %101 = vmatprep.subr.mxu0 0.0
    %102 = vmatpush1.msra.mxu0 0.0
    %103 = vmatprep.subr.mxu0 0.0
    %104 = vmatpush1.msra.mxu0 0.0
    %105 = vmatprep.subr.mxu0 0.0
    %106 = vmatpush1.msra.mxu0 0.0
    %107 = vmatprep.subr.mxu0 0.0
    %108 = vmatpush1.msra.mxu0 0.0
    %109 = vmatprep.subr.mxu0 0.0
    %110 = vmatpush1.msra.mxu0 0.0
    %111 = vmatprep.mubr.f32.mxu0 0.0
    %112 = vmatmul.mubr.f32.gmra.mrb[0].mxu0 %v40
    %v113 = vpop.f32.mrb[0].mxu0
    %v114 = vadd.f32 %v34, %v113
    %v115 = vpop.f32.mrb[0].mxu0
    %v116 = vadd.f32 %v34, %v115
    %117 = vdwg.mxu0
    %v120 = vcombine.low %v114, %v116
    %122 = vst [vmem:[%s3] sm:$0x77] %v120
    %s123 = scalar_lea.vmem [#allocation2], 8
    %v124 = vld [vmem:[%s123] sm:$0xff]
    %v126 = vcombine.high %v124, %v124
    %v127 = vsel %vm42, %v124, 0
    %v129 = vsel %vm42, %v126, 0
    %131 = vmatprep.subr.mxu0 %v129
    %132 = vmatpush1.msra.mxu0 %v127
    %133 = vmatprep.subr.mxu0 0.0
    %134 = vmatpush1.msra.mxu0 0.0
    %135 = vmatprep.subr.mxu0 0.0
    %136 = vmatpush1.msra.mxu0 0.0
    %137 = vmatprep.subr.mxu0 0.0
    %138 = vmatpush1.msra.mxu0 0.0
    %139 = vmatprep.subr.mxu0 0.0
    %140 = vmatpush1.msra.mxu0 0.0
    %141 = vmatprep.subr.mxu0 0.0
    %142 = vmatpush1.msra.mxu0 0.0
    %143 = vmatprep.subr.mxu0 0.0
    %144 = vmatpush1.msra.mxu0 0.0
    %145 = vmatprep.subr.mxu0 0.0
    %146 = vmatpush1.msra.mxu0 0.0
    %147 = vmatprep.subr.mxu0 0.0
    %148 = vmatpush1.msra.mxu0 0.0
    %149 = vmatprep.subr.mxu0 0.0
    %150 = vmatpush1.msra.mxu0 0.0
    %151 = vmatprep.subr.mxu0 0.0
    %152 = vmatpush1.msra.mxu0 0.0
    %153 = vmatprep.subr.mxu0 0.0
    %154 = vmatpush1.msra.mxu0 0.0
    %155 = vmatprep.subr.mxu0 0.0
    %156 = vmatpush1.msra.mxu0 0.0
    %157 = vmatprep.subr.mxu0 0.0
    %158 = vmatpush1.msra.mxu0 0.0
    %159 = vmatprep.subr.mxu0 0.0
    %160 = vmatpush1.msra.mxu0 0.0
    %161 = vmatprep.subr.mxu0 0.0
    %162 = vmatpush1.msra.mxu0 0.0
    %163 = vmatprep.subr.mxu0 0.0
    %164 = vmatpush1.msra.mxu0 0.0
    %165 = vmatprep.subr.mxu0 0.0
    %166 = vmatpush1.msra.mxu0 0.0
    %167 = vmatprep.subr.mxu0 0.0
    %168 = vmatpush1.msra.mxu0 0.0
    %169 = vmatprep.subr.mxu0 0.0
    %170 = vmatpush1.msra.mxu0 0.0
    %171 = vmatprep.subr.mxu0 0.0
    %172 = vmatpush1.msra.mxu0 0.0
    %173 = vmatprep.subr.mxu0 0.0
    %174 = vmatpush1.msra.mxu0 0.0
    %175 = vmatprep.subr.mxu0 0.0
    %176 = vmatpush1.msra.mxu0 0.0
    %177 = vmatprep.subr.mxu0 0.0
    %178 = vmatpush1.msra.mxu0 0.0
    %179 = vmatprep.subr.mxu0 0.0
    %180 = vmatpush1.msra.mxu0 0.0
    %181 = vmatprep.subr.mxu0 0.0
    %182 = vmatpush1.msra.mxu0 0.0
    %183 = vmatprep.subr.mxu0 0.0
    %184 = vmatpush1.msra.mxu0 0.0
    %185 = vmatprep.subr.mxu0 0.0
    %186 = vmatpush1.msra.mxu0 0.0
    %187 = vmatprep.subr.mxu0 0.0
    %188 = vmatpush1.msra.mxu0 0.0
    %189 = vmatprep.subr.mxu0 0.0
    %190 = vmatpush1.msra.mxu0 0.0
    %191 = vmatprep.subr.mxu0 0.0
    %192 = vmatpush1.msra.mxu0 0.0
    %193 = vmatprep.subr.mxu0 0.0
    %194 = vmatpush1.msra.mxu0 0.0
    %195 = vmatprep.mubr.f32.mxu0 0.0
    %196 = vmatmul.mubr.f32.gmra.mrb[0].mxu0 %v40
    %v197 = vpop.f32.mrb[0].mxu0
    %v198 = vadd.f32 %v34, %v197
    %v199 = vpop.f32.mrb[0].mxu0
    %v200 = vadd.f32 %v34, %v199
    %201 = vdwg.mxu0
    %v204 = vcombine.low %v198, %v200
    %s206 = scalar_lea.vmem %s3, 8
    %207 = vst [vmem:[%s206] sm:$0x77] %v204
    // Predicated region
    $region18: #{tpu_custom_call.1} parent=1 // pred_check
      _
    $region19: #{tpu_custom_call.1} parent=1 // pred_check_branch
      %209 = sbr.rel (0) target = $region21
    $region20: #{tpu_custom_call.1} parent=1 // pred_region
      _
    $region21: #{tpu_custom_call.1} parent=1 // pred_fallthru
      _
    // Predicated region
    $region22: #{tpu_custom_call.1} parent=1 // pred_check
      _
    $region23: #{tpu_custom_call.1} parent=1 // pred_check_branch
      %211 = sbr.rel (0) target = $region25
    $region24: #{tpu_custom_call.1} parent=1 // pred_region
      _
    $region25: #{tpu_custom_call.1} parent=1 // pred_fallthru
      _
    %212 = vsyncpa [#allocation3], 1

</llo_original>
